<compile_context>
chip_gen: v5e
topology: v5e:2x2
jax: 0.10.0
libtpu: 0.0.40
codegen_flags: <defaults>
</compile_context>

<pallas_src>
import functools
import math

import jax
import jax.numpy as jnp
from jax import lax
from jax.experimental import pallas as pl
from jax.experimental.pallas import tpu as pltpu

_EPS = 1e-12           # torch F.normalize eps
_EPS2 = _EPS * _EPS
_COUPLING = 0.01       # fv_couping_factor (fv_couple_weights=True)


def _netfv_kernel(x_ref, cw_mm_ref, cw_fin_ref, cov_fin_ref, bias_ref,
                  out_ref, asum_ref, *, d_on_lanes, m_valid, needs_mask):
    """One frames-tile of NetFV.

    x_ref      : (B, TM, D)   streaming input tile (f32 or bf16)
    cw_mm_ref  : (D, K)       cluster_weights, pre-cast to the streaming dtype
    cw_fin_ref : (K, D)|(D,K) cluster_weights f32, matching the out layout
    cov_fin_ref: (K, D)|(D,K) covar_weights   f32, matching the out layout
    bias_ref   : (1, K)       cluster_biases  f32
    out_ref    : (B, 2, K, D) if d_on_lanes else (B, 2, D, K)
                 f32 resident output; doubles as the [fv1 ; fv2_raw] accumulator
    asum_ref   : (B, K)       f32 accumulator for sum_m activation
    """
    t = pl.program_id(0)
    last = pl.num_programs(0) - 1

    B, TM, D = x_ref.shape
    K = cw_mm_ref.shape[1]

    @pl.when(t == 0)
    def _init():
        out_ref[...] = jnp.zeros_like(out_ref)
        asum_ref[...] = jnp.zeros_like(asum_ref)

    x = x_ref[...]                                    # (B, TM, D), streaming dtype
    mm_dtype = x.dtype

    # ---- activation = x @ W + b : one flattened (B*TM, D) x (D, K) MXU dot --
    act = jnp.dot(x.reshape(B * TM, D), cw_mm_ref[...],
                  preferred_element_type=jnp.float32)            # (B*TM, K) f32
    act = (act + bias_ref[...]).reshape(B, TM, K)

    # ---- nn.Softmax() implicit dim on a 3-D tensor -> softmax over batch ----
    act = act - jnp.max(act, axis=0, keepdims=True)
    e = jnp.exp(act)
    act = e * pl.reciprocal(jnp.sum(e, axis=0, keepdims=True), approx=True)

    # ---- zero the padded frames (exact: softmax only couples the batch) -----
    if needs_mask:
        frame = t * TM + lax.broadcasted_iota(jnp.int32, (1, TM, 1), 1)
        act = jnp.where(frame < m_valid, act, 0.0)

    # ---- accumulate a_sum over frames ---------------------------------------
    asum_ref[...] += jnp.sum(act, axis=1)                        # (B, K)

    # ---- two accumulating second-order contractions, straight into out_ref --
    # fv1[b,d,k]    = sum_m x[b,m,d]   * act[b,m,k]
    # fv2raw[b,d,k] = sum_m x[b,m,d]^2 * act[b,m,k]
    act_mm = act.astype(mm_dtype)
    xf = x.astype(jnp.float32)
    xsq = (xf * xf).astype(mm_dtype)
    if d_on_lanes:
        fv1_c = jnp.einsum("bmk,bmd->bkd", act_mm, x,
                           preferred_element_type=jnp.float32)   # (B, K, D)
        fv2_c = jnp.einsum("bmk,bmd->bkd", act_mm, xsq,
                           preferred_element_type=jnp.float32)
    else:
        fv1_c = jnp.einsum("bmd,bmk->bdk", x, act_mm,
                           preferred_element_type=jnp.float32)   # (B, D, K)
        fv2_c = jnp.einsum("bmd,bmk->bdk", xsq, act_mm,
                           preferred_element_type=jnp.float32)
    out_ref[:, 0:1, :, :] += fv1_c[:, None]
    out_ref[:, 1:2, :, :] += fv2_c[:, None]

    # ---- finalize: FV statistics + normalizations (last tile only) ----------
    @pl.when(t == last)
    def _finalize():
        cov = cov_fin_ref[...]
        covar = cov * cov + 1e-6
        inv_cov = pl.reciprocal(covar)          # one-time, exact
        cw2 = cw_fin_ref[...] * _COUPLING       # coupled weights

        a_sum = asum_ref[...]
        if d_on_lanes:
            a_sum = a_sum[:, None, :, None]     # (B, 1, K, 1)
            feat_axis = 3                       # D axis (torch normalize dim=2)
        else:
            a_sum = a_sum[:, None, None, :]     # (B, 1, 1, K)
            feat_axis = 2

        fv1 = out_ref[:, 0:1, :, :]
        fv2 = out_ref[:, 1:2, :, :]

        a = a_sum * cw2
        a2 = a * cw2                             # = a_sum * cw2^2
        b2 = fv1 * cw2
        fv2 = (a2 + fv2 - 2.0 * b2) * (inv_cov * inv_cov) - a_sum
        fv1 = (fv1 - a) * inv_cov

        # fv1: normalize over the feature axis, then over the flattened D*K.
        # 1/max(||x||, eps) == rsqrt(max(ss, eps^2)).
        fv1 = fv1 * lax.rsqrt(jnp.maximum(
            jnp.sum(fv1 * fv1, axis=feat_axis, keepdims=True), _EPS2))
        fv1 = fv1 * lax.rsqrt(jnp.maximum(
            jnp.sum(fv1 * fv1, axis=(2, 3), keepdims=True), _EPS2))

        # fv2: normalized twice over the flattened D*K axis (as in the module).
        fv2 = fv2 * lax.rsqrt(jnp.maximum(
            jnp.sum(fv2 * fv2, axis=(2, 3), keepdims=True), _EPS2))
        fv2 = fv2 * lax.rsqrt(jnp.maximum(
            jnp.sum(fv2 * fv2, axis=(2, 3), keepdims=True), _EPS2))

        out_ref[:, 0:1, :, :] = fv1
        out_ref[:, 1:2, :, :] = fv2


def _round_up(x, m):
    return (x + m - 1) // m * m


def _vmem_capacity_bytes():
    """Chip VMEM capacity (bytes), with a conservative fallback."""
    try:
        info = pltpu.get_tpu_info()
        for name in ("vmem_capacity_bytes", "vmem_size_bytes", "vmem_bytes"):
            v = getattr(info, name, None)
            if v:
                v = int(v)
                if v > 0:
                    return v
    except Exception:
        pass
    return 64 * 1024 * 1024          # v7x-safe fallback


def _pick_tm(B, M, D, K, itemsize, vmem_cap):
    """Largest frames tile (multiple of 8, <=512) whose double-buffered x tile
    fits next to the resident output/params inside ~75% of chip VMEM."""
    out_bytes = B * 2 * D * K * 4
    param_bytes = D * K * (itemsize + 4 + 4) + K * 4
    resident = 2 * out_bytes + 2 * param_bytes + B * K * 4
    budget = int(0.75 * vmem_cap) - resident - (4 << 20)
    per_frame = max(1, B * D * itemsize)
    cap_tm = budget // (2 * per_frame)
    tm = min(cap_tm, 512, _round_up(M, 8))
    tm = max(8, (tm // 8) * 8)
    return int(tm)


def netfv_forward(reshaped_input, cluster_weights, covar_weights,
                  cluster_biases, max_frames, *, tm=None, d_on_lanes=None):
    """NetFV forward (add_batch_norm=False, fv_couple_weights=True).

    reshaped_input: (B, max_frames, feature_size).  Pass it in bfloat16 to
    halve the HBM stream (accumulation / softmax / epilogue stay f32).
    Returns (B, 1, 2 * cluster_size * feature_size) = [fv1 | fv2].
    """
    B, M, D = reshaped_input.shape
    assert M == max_frames, "kernel handles a single segment of max_frames"
    K = cluster_weights.shape[1]

    x = reshaped_input                       # keep caller dtype (f32 or bf16)
    itemsize = int(jnp.dtype(x.dtype).itemsize)
    vmem_cap = _vmem_capacity_bytes()

    if d_on_lanes is None:
        d_on_lanes = K < 128                 # lane-dense accumulator for small K
    if tm is None:
        tm = _pick_tm(B, M, D, K, itemsize, vmem_cap)
    assert tm >= 8 and tm % 8 == 0, tm

    m_pad = _round_up(M, tm)
    if m_pad != M:
        x = jnp.pad(x, ((0, 0), (0, m_pad - M), (0, 0)))
    n_tiles = m_pad // tm
    needs_mask = (m_pad != M)

    cw_f32 = cluster_weights.astype(jnp.float32)
    cov_f32 = covar_weights.astype(jnp.float32)
    bias2d = cluster_biases.reshape(1, K).astype(jnp.float32)
    cw_mm = cw_f32.astype(x.dtype)           # hoisted cast (no-op for f32)
    if d_on_lanes:
        cw_fin, cov_fin = cw_f32.T, cov_f32.T       # (K, D)
        out_minor = (K, D)
    else:
        cw_fin, cov_fin = cw_f32, cov_f32           # (D, K)
        out_minor = (D, K)

    # VMEM budget: double-buffered x tile + resident params + resident output.
    x_tile_bytes = B * tm * D * itemsize
    param_bytes = D * K * (itemsize + 4 + 4) + K * 4
    out_bytes = B * 2 * D * K * 4
    vmem_est = 2 * x_tile_bytes + 2 * param_bytes + 2 * out_bytes + B * K * 4
    vmem_limit = int(min(vmem_cap - (8 << 20),
                         max(3 * vmem_est + (8 << 20), 32 << 20)))
    vmem_limit = max(vmem_limit, 16 << 20)

    cost = pl.CostEstimate(
        flops=6 * B * m_pad * D * K,             # act matmul + two fv matmuls
        transcendentals=B * m_pad * K,           # exp in the softmax
        bytes_accessed=B * m_pad * D * itemsize + 2 * param_bytes + out_bytes,
    )

    kernel = functools.partial(_netfv_kernel, d_on_lanes=d_on_lanes,
                               m_valid=M, needs_mask=needs_mask)

    out = pl.pallas_call(
        kernel,
        out_shape=jax.ShapeDtypeStruct((B, 2) + out_minor, jnp.float32),
        grid=(n_tiles,),
        in_specs=[
            pl.BlockSpec((B, tm, D), lambda t: (0, t, 0)),   # x: streamed frames
            pl.BlockSpec((D, K), lambda t: (0, 0)),          # cluster_weights (mm dtype)
            pl.BlockSpec(out_minor, lambda t: (0, 0)),       # cluster_weights f32 (finalize)
            pl.BlockSpec(out_minor, lambda t: (0, 0)),       # covar_weights  f32 (finalize)
            pl.BlockSpec((1, K), lambda t: (0, 0)),          # cluster_biases
        ],
        out_specs=pl.BlockSpec((B, 2) + out_minor, lambda t: (0, 0, 0, 0)),
        scratch_shapes=[pltpu.VMEM((B, K), jnp.float32)],    # a_sum accumulator
        compiler_params=pltpu.CompilerParams(
            dimension_semantics=("arbitrary",),
            vmem_limit_bytes=vmem_limit,
        ),
        cost_estimate=cost,
    )(x, cw_mm, cw_fin, cov_fin, bias2d)

    if d_on_lanes:
        # (B, 2, K, D) -> (B, 2, D, K): one cheap XLA transpose in the wrapper.
        out = jnp.transpose(out, (0, 1, 3, 2))
    # Row-major (B, 2, D, K) == torch cat([fv1, fv2], dim=2) after the
    # contiguous (B, 1, D, K).view(B, 1, D*K); this reshape is free.
    return out.reshape(B, 1, 2 * D * K)


def netfv_reference(x, cluster_weights, covar_weights, cluster_biases, max_frames):
    """Pure-JAX port of the PyTorch forward (for validation)."""
    x = x.astype(jnp.float32)
    cw = cluster_weights.astype(jnp.float32)
    cov = covar_weights.astype(jnp.float32)
    bias = cluster_biases.astype(jnp.float32)
    B, M, D = x.shape
    K = cw.shape[1]

    covar = cov * cov + 1e-6
    act = jnp.einsum("bmd,dk->bmk", x, cw) + bias
    act = jax.nn.softmax(act, axis=0)                     # implicit dim=0 on 3-D
    act = act.reshape(B, 1, M, K)
    a_sum = jnp.sum(act, axis=-2, keepdims=True)          # (B,1,1,K)
    cw2 = cw * _COUPLING
    a = a_sum * cw2
    actp = jnp.transpose(act, (0, 1, 3, 2))               # (B,1,K,M)
    xr = x.reshape(B, 1, M, D)
    fv1 = jnp.transpose(jnp.matmul(actp, xr), (0, 1, 3, 2))        # (B,1,D,K)
    a2 = a_sum * (cw2 * cw2)
    b2 = fv1 * cw2
    fv2 = jnp.transpose(jnp.matmul(actp, xr * xr), (0, 1, 3, 2))   # (B,1,D,K)
    fv2 = (a2 + fv2 - 2.0 * b2) / (covar * covar) - a_sum
    fv2 = fv2.reshape(B, 1, D * K)
    fv2 = fv2 / jnp.maximum(jnp.linalg.norm(fv2, axis=2, keepdims=True), _EPS)
    fv2 = fv2 / jnp.maximum(jnp.linalg.norm(fv2, axis=2, keepdims=True), _EPS)
    fv1 = (fv1 - a) / covar
    fv1 = fv1 / jnp.maximum(jnp.linalg.norm(fv1, axis=2, keepdims=True), _EPS)
    fv1 = fv1.reshape(B, 1, D * K)
    fv1 = fv1 / jnp.maximum(jnp.linalg.norm(fv1, axis=2, keepdims=True), _EPS)
    return jnp.concatenate([fv1, fv2], axis=2)


if __name__ == "__main__":
    root_key = jax.random.PRNGKey(0)

    def _run_case(B, M, D, K, tm, d_on_lanes, case_id):
        key = jax.random.fold_in(root_key, case_id)
        k_x, k_cw, k_cov, k_b = jax.random.split(key, 4)
        std = 1.0 / math.sqrt(D)
        x = jax.random.normal(k_x, (B, M, D), dtype=jnp.float32)
        cw = std * jax.random.normal(k_cw, (D, K), dtype=jnp.float32)
        cov = 1.0 + std * jax.random.normal(k_cov, (D, K), dtype=jnp.float32)
        bias = std * jax.random.normal(k_b, (K,), dtype=jnp.float32)

        out = netfv_forward(x, cw, cov, bias, max_frames=M, tm=tm,
                            d_on_lanes=d_on_lanes)
        out = jax.block_until_ready(out)
        ref = netfv_reference(x, cw, cov, bias, M)

        assert out.shape == (B, 1, 2 * D * K), out.shape
        assert bool(jnp.all(jnp.isfinite(out)))
        max_err = float(jnp.max(jnp.abs(out - ref)))
        assert max_err < 3e-3, (B, M, D, K, tm, d_on_lanes, max_err)

    # 1) multi-tile frame accumulation, lane-dense (K<128) accumulator layout.
    _run_case(B=2, M=32, D=32, K=16, tm=8, d_on_lanes=None, case_id=1)
    # 2) ragged frame count -> zero-pad to a multiple of tm + post-softmax mask.
    _run_case(B=2, M=29, D=48, K=24, tm=8, d_on_lanes=None, case_id=2)
    # 3) auto tile pick + torch-native D-major accumulator layout (K>=128 path).
    _run_case(B=2, M=32, D=32, K=16, tm=None, d_on_lanes=False, case_id=3)

    print("KERNEL_OK")
</pallas_src>

<mosaic_0001>
module attributes {stable_mosaic.version = 11 : i64} {
  func.func @_netfv_kernel(%arg0: i32, %arg1: memref<2x8x32xf32, #tpu.memory_space<vmem>>, %arg2: memref<32x16xf32, #tpu.memory_space<vmem>>, %arg3: memref<16x32xf32, #tpu.memory_space<vmem>>, %arg4: memref<16x32xf32, #tpu.memory_space<vmem>>, %arg5: memref<1x16xf32, #tpu.memory_space<vmem>>, %arg6: memref<2x2x16x32xf32, #tpu.memory_space<vmem>>, %arg7: memref<2x16xf32, #tpu.memory_space<vmem>>) attributes {dimension_semantics = [#tpu.dimension_semantics<arbitrary>], iteration_bounds = array<i64: 4>, scalar_prefetch = 0 : i64, scratch_operands = 1 : i64, tpu.core_type = #tpu.core_type<tc>, window_params = [{transform_indices = @transform_0, window_bounds = array<i64: 2, 8, 32>}, {pipeline_mode = #tpu.pipeline_mode<synchronous>, transform_indices = @transform_1, window_bounds = array<i64: 32, 16>}, {pipeline_mode = #tpu.pipeline_mode<synchronous>, transform_indices = @transform_2, window_bounds = array<i64: 16, 32>}, {pipeline_mode = #tpu.pipeline_mode<synchronous>, transform_indices = @transform_3, window_bounds = array<i64: 16, 32>}, {pipeline_mode = #tpu.pipeline_mode<synchronous>, transform_indices = @transform_4, window_bounds = array<i64: 1, 16>}, {pipeline_mode = #tpu.pipeline_mode<synchronous>, transform_indices = @transform_5, window_bounds = array<i64: 2, 2, 16, 32>}]} {
    %c0_i32 = arith.constant 0 : i32
    %0 = arith.cmpi eq, %arg0, %c0_i32 : i32
    %1 = arith.extui %0 : i1 to i32
    %c0_i32_0 = arith.constant 0 : i32
    %2 = arith.cmpi ne, %1, %c0_i32_0 : i32
    scf.if %2 {
      %cst_32 = arith.constant 0.000000e+00 : f32
      %39 = vector.broadcast %cst_32 : f32 to vector<2x2x16x32xf32>
      %c0_33 = arith.constant 0 : index
      %c0_34 = arith.constant 0 : index
      %c0_35 = arith.constant 0 : index
      %c0_36 = arith.constant 0 : index
      %40 = vector.load %arg6[%c0_33, %c0_34, %c0_35, %c0_36] : memref<2x2x16x32xf32, #tpu.memory_space<vmem>>, vector<2x2x16x32xf32>
      tpu.vector_store %arg6[%c0_33, %c0_34, %c0_35, %c0_36], %39 {strides = array<i32>} : memref<2x2x16x32xf32, #tpu.memory_space<vmem>>, vector<2x2x16x32xf32>,
      %cst_37 = arith.constant 0.000000e+00 : f32
      %41 = vector.broadcast %cst_37 : f32 to vector<2x16xf32>
      %c0_38 = arith.constant 0 : index
      %c0_39 = arith.constant 0 : index
      %42 = vector.load %arg7[%c0_38, %c0_39] : memref<2x16xf32, #tpu.memory_space<vmem>>, vector<2x16xf32>
      tpu.vector_store %arg7[%c0_38, %c0_39], %41 {strides = array<i32>} : memref<2x16xf32, #tpu.memory_space<vmem>>, vector<2x16xf32>,
    } else {
    }
    %c0 = arith.constant 0 : index
    %c0_1 = arith.constant 0 : index
    %c0_2 = arith.constant 0 : index
    %3 = vector.load %arg1[%c0, %c0_1, %c0_2] : memref<2x8x32xf32, #tpu.memory_space<vmem>>, vector<2x8x32xf32>
    %4 = vector.shape_cast %3 : vector<2x8x32xf32> to vector<16x32xf32>
    %c0_3 = arith.constant 0 : index
    %c0_4 = arith.constant 0 : index
    %5 = vector.load %arg2[%c0_3, %c0_4] : memref<32x16xf32, #tpu.memory_space<vmem>>, vector<32x16xf32>
    %cst = arith.constant dense<0.000000e+00> : vector<16x16xf32>
    %6 = tpu.matmul %4, %5, %cst {dimension_numbers = #tpu.dot_dimension_numbers<[1], [0], [0], [1], [0, 0, 1, 1], [], []>} : vector<16x32xf32>, vector<32x16xf32>, vector<16x16xf32> -> vector<16x16xf32>
    %c0_5 = arith.constant 0 : index
    %c0_6 = arith.constant 0 : index
    %7 = vector.load %arg5[%c0_5, %c0_6] : memref<1x16xf32, #tpu.memory_space<vmem>>, vector<1x16xf32>
    %8 = vector.broadcast %7 : vector<1x16xf32> to vector<16x16xf32>
    %9 = arith.addf %6, %8 : vector<16x16xf32>
    %10 = vector.shape_cast %9 : vector<16x16xf32> to vector<2x8x16xf32>
    %cst_7 = arith.constant dense<0xFF800000> : vector<8x16xf32>
    %11 = vector.multi_reduction <maximumf>, %10, %cst_7 [0] : vector<2x8x16xf32> to vector<8x16xf32>
    %12 = vector.shape_cast %11 : vector<8x16xf32> to vector<1x8x16xf32>
    %13 = vector.broadcast %12 : vector<1x8x16xf32> to vector<2x8x16xf32>
    %14 = arith.subf %10, %13 : vector<2x8x16xf32>
    %15 = math.exp %14 : vector<2x8x16xf32>
    %cst_8 = arith.constant dense<0.000000e+00> : vector<8x16xf32>
    %16 = vector.multi_reduction <add>, %15, %cst_8 [0] : vector<2x8x16xf32> to vector<8x16xf32>
    %17 = vector.shape_cast %16 : vector<8x16xf32> to vector<1x8x16xf32>
    %18 = tpu.reciprocal %17 {approx = true} : vector<1x8x16xf32> -> vector<1x8x16xf32>
    %19 = vector.broadcast %18 : vector<1x8x16xf32> to vector<2x8x16xf32>
    %20 = arith.mulf %15, %19 : vector<2x8x16xf32>
    %c0_9 = arith.constant 0 : index
    %c0_10 = arith.constant 0 : index
    %21 = vector.load %arg7[%c0_9, %c0_10] : memref<2x16xf32, #tpu.memory_space<vmem>>, vector<2x16xf32>
    %cst_11 = arith.constant dense<0.000000e+00> : vector<2x16xf32>
    %22 = vector.multi_reduction <add>, %20, %cst_11 [1] : vector<2x8x16xf32> to vector<2x16xf32>
    %23 = arith.addf %21, %22 : vector<2x16xf32>
    %c0_12 = arith.constant 0 : index
    %c0_13 = arith.constant 0 : index
    %24 = vector.load %arg7[%c0_12, %c0_13] : memref<2x16xf32, #tpu.memory_space<vmem>>, vector<2x16xf32>
    tpu.vector_store %arg7[%c0_12, %c0_13], %23 {strides = array<i32>} : memref<2x16xf32, #tpu.memory_space<vmem>>, vector<2x16xf32>,
    %25 = arith.mulf %3, %3 : vector<2x8x32xf32>
    "tpu.trace_start"() <{level = 10 : i32, message = "bmk,bmd->bkd"}> : () -> ()
    %cst_14 = arith.constant dense<0.000000e+00> : vector<2x16x32xf32>
    %26 = tpu.matmul %20, %3, %cst_14 {dimension_numbers = #tpu.dot_dimension_numbers<[1], [1], [2], [2], [0, 0, 0, 2, 1, 2], [0], [0]>} : vector<2x8x16xf32>, vector<2x8x32xf32>, vector<2x16x32xf32> -> vector<2x16x32xf32>
    %cst_15 = arith.constant dense<0.000000e+00> : vector<2x16x32xf32>
    %27 = tpu.matmul %20, %25, %cst_15 {dimension_numbers = #tpu.dot_dimension_numbers<[1], [1], [2], [2], [0, 0, 0, 2, 1, 2], [0], [0]>} : vector<2x8x16xf32>, vector<2x8x32xf32>, vector<2x16x32xf32> -> vector<2x16x32xf32>
    "tpu.trace_stop"() : () -> ()
    %c0_16 = arith.constant 0 : index
    %c0_17 = arith.constant 0 : index
    %c0_18 = arith.constant 0 : index
    %c0_19 = arith.constant 0 : index
    %28 = vector.load %arg6[%c0_16, %c0_17, %c0_18, %c0_19] : memref<2x2x16x32xf32, #tpu.memory_space<vmem>>, vector<2x1x16x32xf32>
    %29 = vector.shape_cast %26 : vector<2x16x32xf32> to vector<2x1x16x32xf32>
    %30 = arith.addf %28, %29 : vector<2x1x16x32xf32>
    %c0_20 = arith.constant 0 : index
    %c0_21 = arith.constant 0 : index
    %c0_22 = arith.constant 0 : index
    %c0_23 = arith.constant 0 : index
    %31 = vector.load %arg6[%c0_20, %c0_21, %c0_22, %c0_23] : memref<2x2x16x32xf32, #tpu.memory_space<vmem>>, vector<2x1x16x32xf32>
    tpu.vector_store %arg6[%c0_20, %c0_21, %c0_22, %c0_23], %30 {strides = array<i32>} : memref<2x2x16x32xf32, #tpu.memory_space<vmem>>, vector<2x1x16x32xf32>,
    %c0_24 = arith.constant 0 : index
    %c1 = arith.constant 1 : index
    %c0_25 = arith.constant 0 : index
    %c0_26 = arith.constant 0 : index
    %32 = vector.load %arg6[%c0_24, %c1, %c0_25, %c0_26] : memref<2x2x16x32xf32, #tpu.memory_space<vmem>>, vector<2x1x16x32xf32>
    %33 = vector.shape_cast %27 : vector<2x16x32xf32> to vector<2x1x16x32xf32>
    %34 = arith.addf %32, %33 : vector<2x1x16x32xf32>
    %c0_27 = arith.constant 0 : index
    %c1_28 = arith.constant 1 : index
    %c0_29 = arith.constant 0 : index
    %c0_30 = arith.constant 0 : index
    %35 = vector.load %arg6[%c0_27, %c1_28, %c0_29, %c0_30] : memref<2x2x16x32xf32, #tpu.memory_space<vmem>>, vector<2x1x16x32xf32>
    tpu.vector_store %arg6[%c0_27, %c1_28, %c0_29, %c0_30], %34 {strides = array<i32>} : memref<2x2x16x32xf32, #tpu.memory_space<vmem>>, vector<2x1x16x32xf32>,
    %c3_i32 = arith.constant 3 : i32
    %36 = arith.cmpi eq, %arg0, %c3_i32 : i32
    %37 = arith.extui %36 : i1 to i32
    %c0_i32_31 = arith.constant 0 : i32
    %38 = arith.cmpi ne, %37, %c0_i32_31 : i32
    scf.if %38 {
      %c0_32 = arith.constant 0 : index
      %c0_33 = arith.constant 0 : index
      %39 = vector.load %arg4[%c0_32, %c0_33] : memref<16x32xf32, #tpu.memory_space<vmem>>, vector<16x32xf32>
      %40 = arith.mulf %39, %39 : vector<16x32xf32>
      %cst_34 = arith.constant 9.99999997E-7 : f32
      %41 = vector.broadcast %cst_34 : f32 to vector<16x32xf32>
      %42 = arith.addf %40, %41 : vector<16x32xf32>
      %43 = tpu.reciprocal %42 : vector<16x32xf32> -> vector<16x32xf32>
      %c0_35 = arith.constant 0 : index
      %c0_36 = arith.constant 0 : index
      %44 = vector.load %arg3[%c0_35, %c0_36] : memref<16x32xf32, #tpu.memory_space<vmem>>, vector<16x32xf32>
      %cst_37 = arith.constant 0.00999999977 : f32
      %45 = vector.broadcast %cst_37 : f32 to vector<16x32xf32>
      %46 = arith.mulf %44, %45 : vector<16x32xf32>
      %c0_38 = arith.constant 0 : index
      %c0_39 = arith.constant 0 : index
      %47 = vector.load %arg7[%c0_38, %c0_39] : memref<2x16xf32, #tpu.memory_space<vmem>>, vector<2x16xf32>
      %48 = vector.shape_cast %47 : vector<2x16xf32> to vector<2x1x16x1xf32>
      %c0_40 = arith.constant 0 : index
      %c0_41 = arith.constant 0 : index
      %c0_42 = arith.constant 0 : index
      %c0_43 = arith.constant 0 : index
      %49 = vector.load %arg6[%c0_40, %c0_41, %c0_42, %c0_43] : memref<2x2x16x32xf32, #tpu.memory_space<vmem>>, vector<2x1x16x32xf32>
      %c0_44 = arith.constant 0 : index
      %c1_45 = arith.constant 1 : index
      %c0_46 = arith.constant 0 : index
      %c0_47 = arith.constant 0 : index
      %50 = vector.load %arg6[%c0_44, %c1_45, %c0_46, %c0_47] : memref<2x2x16x32xf32, #tpu.memory_space<vmem>>, vector<2x1x16x32xf32>
      %51 = vector.shape_cast %46 : vector<16x32xf32> to vector<1x1x16x32xf32>
      %52 = vector.broadcast %48 : vector<2x1x16x1xf32> to vector<2x1x16x32xf32>
      %53 = vector.broadcast %51 : vector<1x1x16x32xf32> to vector<2x1x16x32xf32>
      %54 = arith.mulf %52, %53 : vector<2x1x16x32xf32>
      %55 = vector.shape_cast %46 : vector<16x32xf32> to vector<1x1x16x32xf32>
      %56 = vector.broadcast %55 : vector<1x1x16x32xf32> to vector<2x1x16x32xf32>
      %57 = arith.mulf %54, %56 : vector<2x1x16x32xf32>
      %58 = vector.shape_cast %46 : vector<16x32xf32> to vector<1x1x16x32xf32>
      %59 = vector.broadcast %58 : vector<1x1x16x32xf32> to vector<2x1x16x32xf32>
      %60 = arith.mulf %49, %59 : vector<2x1x16x32xf32>
      %61 = arith.addf %57, %50 : vector<2x1x16x32xf32>
      %cst_48 = arith.constant 2.000000e+00 : f32
      %62 = vector.broadcast %cst_48 : f32 to vector<2x1x16x32xf32>
      %63 = arith.mulf %62, %60 : vector<2x1x16x32xf32>
      %64 = arith.subf %61, %63 : vector<2x1x16x32xf32>
      %65 = arith.mulf %43, %43 : vector<16x32xf32>
      %66 = vector.shape_cast %65 : vector<16x32xf32> to vector<1x1x16x32xf32>
      %67 = vector.broadcast %66 : vector<1x1x16x32xf32> to vector<2x1x16x32xf32>
      %68 = arith.mulf %64, %67 : vector<2x1x16x32xf32>
      %69 = vector.broadcast %48 : vector<2x1x16x1xf32> to vector<2x1x16x32xf32>
      %70 = arith.subf %68, %69 : vector<2x1x16x32xf32>
      %71 = arith.subf %49, %54 : vector<2x1x16x32xf32>
      %72 = vector.shape_cast %43 : vector<16x32xf32> to vector<1x1x16x32xf32>
      %73 = vector.broadcast %72 : vector<1x1x16x32xf32> to vector<2x1x16x32xf32>
      %74 = arith.mulf %71, %73 : vector<2x1x16x32xf32>
      %75 = arith.mulf %74, %74 : vector<2x1x16x32xf32>
      %cst_49 = arith.constant dense<0.000000e+00> : vector<2x1x16xf32>
      %76 = vector.multi_reduction <add>, %75, %cst_49 [3] : vector<2x1x16x32xf32> to vector<2x1x16xf32>
      %77 = vector.shape_cast %76 : vector<2x1x16xf32> to vector<2x1x16x1xf32>
      %cst_50 = arith.constant 1.000000e-24 : f32
      %78 = vector.broadcast %cst_50 : f32 to vector<2x1x16x1xf32>
      %79 = arith.maximumf %77, %78 : vector<2x1x16x1xf32>
      %80 = math.rsqrt %79 : vector<2x1x16x1xf32>
      %81 = vector.broadcast %80 : vector<2x1x16x1xf32> to vector<2x1x16x32xf32>
      %82 = arith.mulf %74, %81 : vector<2x1x16x32xf32>
      %83 = arith.mulf %82, %82 : vector<2x1x16x32xf32>
      %cst_51 = arith.constant dense<0.000000e+00> : vector<2x1xf32>
      %84 = vector.multi_reduction <add>, %83, %cst_51 [2, 3] : vector<2x1x16x32xf32> to vector<2x1xf32>
      %85 = vector.shape_cast %84 : vector<2x1xf32> to vector<2x1x1x1xf32>
      %cst_52 = arith.constant 1.000000e-24 : f32
      %86 = vector.broadcast %cst_52 : f32 to vector<2x1x1x1xf32>
      %87 = arith.maximumf %85, %86 : vector<2x1x1x1xf32>
      %88 = math.rsqrt %87 : vector<2x1x1x1xf32>
      %89 = vector.broadcast %88 : vector<2x1x1x1xf32> to vector<2x1x16x32xf32>
      %90 = arith.mulf %82, %89 : vector<2x1x16x32xf32>
      %91 = arith.mulf %70, %70 : vector<2x1x16x32xf32>
      %cst_53 = arith.constant dense<0.000000e+00> : vector<2x1xf32>
      %92 = vector.multi_reduction <add>, %91, %cst_53 [2, 3] : vector<2x1x16x32xf32> to vector<2x1xf32>
      %93 = vector.shape_cast %92 : vector<2x1xf32> to vector<2x1x1x1xf32>
      %cst_54 = arith.constant 1.000000e-24 : f32
      %94 = vector.broadcast %cst_54 : f32 to vector<2x1x1x1xf32>
      %95 = arith.maximumf %93, %94 : vector<2x1x1x1xf32>
      %96 = math.rsqrt %95 : vector<2x1x1x1xf32>
      %97 = vector.broadcast %96 : vector<2x1x1x1xf32> to vector<2x1x16x32xf32>
      %98 = arith.mulf %70, %97 : vector<2x1x16x32xf32>
      %99 = arith.mulf %98, %98 : vector<2x1x16x32xf32>
      %cst_55 = arith.constant dense<0.000000e+00> : vector<2x1xf32>
      %100 = vector.multi_reduction <add>, %99, %cst_55 [2, 3] : vector<2x1x16x32xf32> to vector<2x1xf32>
      %101 = vector.shape_cast %100 : vector<2x1xf32> to vector<2x1x1x1xf32>
      %cst_56 = arith.constant 1.000000e-24 : f32
      %102 = vector.broadcast %cst_56 : f32 to vector<2x1x1x1xf32>
      %103 = arith.maximumf %101, %102 : vector<2x1x1x1xf32>
      %104 = math.rsqrt %103 : vector<2x1x1x1xf32>
      %105 = vector.broadcast %104 : vector<2x1x1x1xf32> to vector<2x1x16x32xf32>
      %106 = arith.mulf %98, %105 : vector<2x1x16x32xf32>
      %c0_57 = arith.constant 0 : index
      %c0_58 = arith.constant 0 : index
      %c0_59 = arith.constant 0 : index
      %c0_60 = arith.constant 0 : index
      %107 = vector.load %arg6[%c0_57, %c0_58, %c0_59, %c0_60] : memref<2x2x16x32xf32, #tpu.memory_space<vmem>>, vector<2x1x16x32xf32>
      tpu.vector_store %arg6[%c0_57, %c0_58, %c0_59, %c0_60], %90 {strides = array<i32>} : memref<2x2x16x32xf32, #tpu.memory_space<vmem>>, vector<2x1x16x32xf32>,
      %c0_61 = arith.constant 0 : index
      %c1_62 = arith.constant 1 : index
      %c0_63 = arith.constant 0 : index
      %c0_64 = arith.constant 0 : index
      %108 = vector.load %arg6[%c0_61, %c1_62, %c0_63, %c0_64] : memref<2x2x16x32xf32, #tpu.memory_space<vmem>>, vector<2x1x16x32xf32>
      tpu.vector_store %arg6[%c0_61, %c1_62, %c0_63, %c0_64], %106 {strides = array<i32>} : memref<2x2x16x32xf32, #tpu.memory_space<vmem>>, vector<2x1x16x32xf32>,
    } else {
    }
    return
  }
  func.func @transform_0(%arg0: i32) -> (i32, i32, i32) {
    %c0_i32 = arith.constant 0 : i32
    %c0_i32_0 = arith.constant 0 : i32
    %c0_i32_1 = arith.constant 0 : i32
    return %c0_i32, %arg0, %c0_i32_0 : i32, i32, i32
  }
  func.func @transform_1(%arg0: i32) -> (i32, i32) {
    %c0_i32 = arith.constant 0 : i32
    %c0_i32_0 = arith.constant 0 : i32
    %c0_i32_1 = arith.constant 0 : i32
    return %c0_i32, %c0_i32_0 : i32, i32
  }
  func.func @transform_2(%arg0: i32) -> (i32, i32) {
    %c0_i32 = arith.constant 0 : i32
    %c0_i32_0 = arith.constant 0 : i32
    %c0_i32_1 = arith.constant 0 : i32
    return %c0_i32, %c0_i32_0 : i32, i32
  }
  func.func @transform_3(%arg0: i32) -> (i32, i32) {
    %c0_i32 = arith.constant 0 : i32
    %c0_i32_0 = arith.constant 0 : i32
    %c0_i32_1 = arith.constant 0 : i32
    return %c0_i32, %c0_i32_0 : i32, i32
  }
  func.func @transform_4(%arg0: i32) -> (i32, i32) {
    %c0_i32 = arith.constant 0 : i32
    %c0_i32_0 = arith.constant 0 : i32
    %c0_i32_1 = arith.constant 0 : i32
    return %c0_i32, %c0_i32_0 : i32, i32
  }
  func.func @transform_5(%arg0: i32) -> (i32, i32, i32, i32) {
    %c0_i32 = arith.constant 0 : i32
    %c0_i32_0 = arith.constant 0 : i32
    %c0_i32_1 = arith.constant 0 : i32
    %c0_i32_2 = arith.constant 0 : i32
    %c0_i32_3 = arith.constant 0 : i32
    return %c0_i32, %c0_i32_0, %c0_i32_1, %c0_i32_2 : i32, i32, i32, i32
  }
}

</mosaic_0001>

<llo_original>
// kernel: tpu_custom_call.1
$region0: #{tpu_custom_call.1}
  #allocation0 [shape = 'u32[]', space=smem, size = 0x4, offset = 0x4, fixed_abs, tag = 'smem constant byte address 0x4 - core index']
  #allocation1 [shape = 'u32[72,128]{1,0:T(1,128)}', space=vmem, size = 0x9000, scoped, tag = 'internal scratch']
  #allocation2 [shape = 'f32[2,16]{1,0:T(2,128)}', space=vmem, size = 0x400, scoped, tag = 'scratch operand']
  %s0 = inlined_call_operand.hbm [shape: f32[2,32,32], index: 0, kind: input, shape index: {}]
  %s1 = inlined_call_operand.vmem [shape: f32[32,16], index: 1, kind: input, shape index: {}]
  %s2 = inlined_call_operand.vmem [shape: f32[16,32], index: 2, kind: input, shape index: {}]
  %s3 = inlined_call_operand.vmem [shape: f32[16,32], index: 3, kind: input, shape index: {}]
  %s4 = inlined_call_operand.vmem [shape: f32[1,16], index: 4, kind: input, shape index: {}]
  %s5 = inlined_call_operand.hbm [shape: f32[2,2,16,32], index: 5, kind: output, shape index: {}]
  %s6 = sld [smem:[#allocation0]]
  $region65: #{tpu_custom_call.1} parent=0
    _
  %s8 = ssub.s32 1, %s6
  %s9 = scalar_select 0, %s8, %s6
  $region1: #{tpu_custom_call.1} parent=0
    #allocation3 [shape = 'u8[16384]{0}', space=vmem, size = 0x4000, scoped, tag = 'input window, operand 0']
    #allocation4 [shape = 's32[2]{0}', space=sflag, size = 0x8, scoped, tag = 'scoped memory for tpu_custom_call.1']
    #allocation5 [shape = 's32[2]{0}', space=sflag, size = 0x8, scoped, tag = 'scoped memory for tpu_custom_call.1']
    #allocation6 [shape = 'u8[32768]{0}', space=vmem, size = 0x8000, scoped, tag = 'output window, operand 0, single buffered']
    %10 = vsyncpa [#allocation4], 0
    %s11 = scalar_lea.sflag [#allocation4], 1
    %12 = vsyncpa %s11, 0
    %13 = vsyncpa [#allocation5], 0
    loop: start=0, step=1, limit=6
    $region2: #{tpu_custom_call.1} parent=1 // loop_pre_header
      _
    $region3: #{tpu_custom_call.1} parent=1 // loop_header
      %s15 = sphi 0, %s19
      %p16 = scmp.ge.s32.totalorder %s15, 6
      %s25 = sphi 0, %s27
      %s28 = sphi 0, %s25
      %s29 = sphi 0, %s28
      %s45 = sphi 0, %s29
      %s49 = sphi 0, %s49
      %s51 = sphi 0, %s49
      %s52 = sphi 0, %s51
      %s66 = sphi 0, %s52
      %s70 = sphi 0, %s70
      %s72 = sphi 0, %s70
      %s73 = sphi 0, %s72
      %s87 = sphi 0, %s73
      %s91 = sphi 0, %s91
      %s93 = sphi 0, %s91
      %s94 = sphi 0, %s93
      %s108 = sphi 0, %s94
      %s112 = sphi 0, %s112
      %s114 = sphi 0, %s112
      %s115 = sphi 0, %s114
      %s129 = sphi 0, %s115
      %s133 = sphi 0, %s133
      %s135 = sphi 0, %s133
      %s136 = sphi 0, %s135
      %s150 = sphi 0, %s136
    $region4: #{tpu_custom_call.1} parent=1 // loop_header_branch
      %18 = sbr.rel (%p16) target = $region8
    $region5: #{tpu_custom_call.1} parent=1 // loop_body
      %s20 = ssub.s32 %s15, 1
      %s21 = ssub.s32 %s15, 2
      %s22 = sadd.s32 %s15, 1
      %s23 = ssub.s32 %s15, %s22
      %p24 = scmp.eq.s32.totalorder %s23, 0
      %s26 = sadd.s32 %s25, 1
      %s27 = scalar_select %p24, %s25, %s26
      %p30 = pneg %p24
      %p31 = scmp.eq.s32.totalorder %s15, 3
      %p32 = por %p30, %p31
      %p33 = scmp.ne.s32.totalorder %s25, %s28
      %p34 = scmp.eq.s32.totalorder %s15, 0
      %p35 = por %p33, %p34
      %p36 = scmp.ne.s32.totalorder %s25, %s28
      %p37 = scmp.eq.s32.totalorder %s20, 3
      %p38 = por %p36, %p37
      %p39 = scmp.ne.s32.totalorder %s28, %s29
      %p40 = scmp.eq.s32.totalorder %s20, 0
      %p41 = por %p39, %p40
      %p42 = scmp.ne.s32.totalorder %s28, %s29
      %p43 = scmp.eq.s32.totalorder %s21, 3
      %p44 = por %p42, %p43
      %p46 = scmp.ne.s32.totalorder %s29, %s45
      %p47 = scmp.eq.s32.totalorder %s21, 0
      %p48 = por %p46, %p47
      %s50 = sadd.s32 %s49, 1
      %p53 = scmp.eq.s32.totalorder %s15, 3
      %p54 = scmp.ne.s32.totalorder %s49, %s51
      %p55 = scmp.eq.s32.totalorder %s15, 0
      %p56 = por %p54, %p55
      %p57 = scmp.ne.s32.totalorder %s49, %s51
      %p58 = scmp.eq.s32.totalorder %s20, 3
      %p59 = por %p57, %p58
      %p60 = scmp.ne.s32.totalorder %s51, %s52
      %p61 = scmp.eq.s32.totalorder %s20, 0
      %p62 = por %p60, %p61
      %p63 = scmp.ne.s32.totalorder %s51, %s52
      %p64 = scmp.eq.s32.totalorder %s21, 3
      %p65 = por %p63, %p64
      %p67 = scmp.ne.s32.totalorder %s52, %s66
      %p68 = scmp.eq.s32.totalorder %s21, 0
      %p69 = por %p67, %p68
      %s71 = sadd.s32 %s70, 1
      %p74 = scmp.eq.s32.totalorder %s15, 3
      %p75 = scmp.ne.s32.totalorder %s70, %s72
      %p76 = scmp.eq.s32.totalorder %s15, 0
      %p77 = por %p75, %p76
      %p78 = scmp.ne.s32.totalorder %s70, %s72
      %p79 = scmp.eq.s32.totalorder %s20, 3
      %p80 = por %p78, %p79
      %p81 = scmp.ne.s32.totalorder %s72, %s73
      %p82 = scmp.eq.s32.totalorder %s20, 0
      %p83 = por %p81, %p82
      %p84 = scmp.ne.s32.totalorder %s72, %s73
      %p85 = scmp.eq.s32.totalorder %s21, 3
      %p86 = por %p84, %p85
      %p88 = scmp.ne.s32.totalorder %s73, %s87
      %p89 = scmp.eq.s32.totalorder %s21, 0
      %p90 = por %p88, %p89
      %s92 = sadd.s32 %s91, 1
      %p95 = scmp.eq.s32.totalorder %s15, 3
      %p96 = scmp.ne.s32.totalorder %s91, %s93
      %p97 = scmp.eq.s32.totalorder %s15, 0
      %p98 = por %p96, %p97
      %p99 = scmp.ne.s32.totalorder %s91, %s93
      %p100 = scmp.eq.s32.totalorder %s20, 3
      %p101 = por %p99, %p100
      %p102 = scmp.ne.s32.totalorder %s93, %s94
      %p103 = scmp.eq.s32.totalorder %s20, 0
      %p104 = por %p102, %p103
      %p105 = scmp.ne.s32.totalorder %s93, %s94
      %p106 = scmp.eq.s32.totalorder %s21, 3
      %p107 = por %p105, %p106
      %p109 = scmp.ne.s32.totalorder %s94, %s108
      %p110 = scmp.eq.s32.totalorder %s21, 0
      %p111 = por %p109, %p110
      %s113 = sadd.s32 %s112, 1
      %p116 = scmp.eq.s32.totalorder %s15, 3
      %p117 = scmp.ne.s32.totalorder %s112, %s114
      %p118 = scmp.eq.s32.totalorder %s15, 0
      %p119 = por %p117, %p118
      %p120 = scmp.ne.s32.totalorder %s112, %s114
      %p121 = scmp.eq.s32.totalorder %s20, 3
      %p122 = por %p120, %p121
      %p123 = scmp.ne.s32.totalorder %s114, %s115
      %p124 = scmp.eq.s32.totalorder %s20, 0
      %p125 = por %p123, %p124
      %p126 = scmp.ne.s32.totalorder %s114, %s115
      %p127 = scmp.eq.s32.totalorder %s21, 3
      %p128 = por %p126, %p127
      %p130 = scmp.ne.s32.totalorder %s115, %s129
      %p131 = scmp.eq.s32.totalorder %s21, 0
      %p132 = por %p130, %p131
      %s134 = sadd.s32 %s133, 1
      %p137 = scmp.eq.s32.totalorder %s15, 3
      %p138 = scmp.ne.s32.totalorder %s133, %s135
      %p139 = scmp.eq.s32.totalorder %s15, 0
      %p140 = por %p138, %p139
      %p141 = scmp.ne.s32.totalorder %s133, %s135
      %p142 = scmp.eq.s32.totalorder %s20, 3
      %p143 = por %p141, %p142
      %p144 = scmp.ne.s32.totalorder %s135, %s136
      %p145 = scmp.eq.s32.totalorder %s20, 0
      %p146 = por %p144, %p145
      %p147 = scmp.ne.s32.totalorder %s135, %s136
      %p148 = scmp.eq.s32.totalorder %s21, 3
      %p149 = por %p147, %p148
      %p151 = scmp.ne.s32.totalorder %s136, %s150
      %p152 = scmp.eq.s32.totalorder %s21, 0
      %p153 = por %p151, %p152
      %p154 = scmp.le.s32.totalorder 1, %s15
      %p155 = scmp.lt.s32.totalorder %s15, 5
      %p156 = pnand %p154, %p155
      %p157 = pneg %p156
      // Predicated region
      $region9: #{tpu_custom_call.1} parent=5 // pred_check
        _
      $region10: #{tpu_custom_call.1} parent=5 // pred_check_branch
        %159 = sbr.rel (%p156) target = $region12
      $region11: #{tpu_custom_call.1} parent=5 // pred_region
        %s160 = ssub.s32 %s15, 1
        // Predicated region
        $region13: #{tpu_custom_call.1} parent=11 // pred_check
          %p161 = pneg %p62
        $region14: #{tpu_custom_call.1} parent=11 // pred_check_branch
          %163 = sbr.rel (%p161) target = $region16
        $region15: #{tpu_custom_call.1} parent=11 // pred_region
          _
        $region16: #{tpu_custom_call.1} parent=11 // pred_fallthru
          _
        // Predicated region
        $region17: #{tpu_custom_call.1} parent=11 // pred_check
          %p164 = pneg %p83
        $region18: #{tpu_custom_call.1} parent=11 // pred_check_branch
          %166 = sbr.rel (%p164) target = $region20
        $region19: #{tpu_custom_call.1} parent=11 // pred_region
          _
        $region20: #{tpu_custom_call.1} parent=11 // pred_fallthru
          _
        // Predicated region
        $region21: #{tpu_custom_call.1} parent=11 // pred_check
          %p167 = pneg %p104
        $region22: #{tpu_custom_call.1} parent=11 // pred_check_branch
          %169 = sbr.rel (%p167) target = $region24
        $region23: #{tpu_custom_call.1} parent=11 // pred_region
          _
        $region24: #{tpu_custom_call.1} parent=11 // pred_fallthru
          _
        // Predicated region
        $region25: #{tpu_custom_call.1} parent=11 // pred_check
          %p170 = pneg %p125
        $region26: #{tpu_custom_call.1} parent=11 // pred_check_branch
          %172 = sbr.rel (%p170) target = $region28
        $region27: #{tpu_custom_call.1} parent=11 // pred_region
          _
        $region28: #{tpu_custom_call.1} parent=11 // pred_fallthru
          _
      $region12: #{tpu_custom_call.1} parent=5 // pred_fallthru
        _
      %p173 = scmp.lt.s32.totalorder %s15, 4
      // Predicated region
      $region29: #{tpu_custom_call.1} parent=5 // pred_check
        %p174 = pneg %p173
      $region30: #{tpu_custom_call.1} parent=5 // pred_check_branch
        %176 = sbr.rel (%p174) target = $region32
      $region31: #{tpu_custom_call.1} parent=5 // pred_region
        // Predicated region
        $region33: #{tpu_custom_call.1} parent=31 // pred_check
          %p177 = pneg %p35
        $region34: #{tpu_custom_call.1} parent=31 // pred_check_branch
          %179 = sbr.rel (%p177) target = $region36
        $region35: #{tpu_custom_call.1} parent=31 // pred_region
          %s180 = sand.u32 %s25, 1
          %s181 = scalar_lea.sflag [#allocation4], %s180
          %s182 = sand.u32 %s25, 1
          %s183 = smul.addr %s182, 16
          %s184 = scalar_lea.vmem [#allocation3], %s183
          %186 = vsyncadd %s181, 0
          %s187 = smul.addr %s15, 8
          %s188 = scalar_lea.hbm %s0, %s187
          %s189 = sshll.u32 %s188, 4
          %s190 = int_to_ptr.hbm [resolvable:$true] %s189
          %s191 = sshll.u32 %s184, 4
          %s192 = int_to_ptr.vmem [resolvable:$true] %s191
          %197 = dma.hbm_to_vmem [thread:$0]  %s190, 256, %s192, %s181, 512, 128, 8
        $region36: #{tpu_custom_call.1} parent=31 // pred_fallthru
          _
      $region32: #{tpu_custom_call.1} parent=5 // pred_fallthru
        _
      %p198 = scmp.le.s32.totalorder 1, %s15
      %p199 = scmp.lt.s32.totalorder %s15, 5
      %p200 = pnand %p198, %p199
      %p201 = pneg %p200
      // Predicated region
      $region37: #{tpu_custom_call.1} parent=5 // pred_check
        _
      $region38: #{tpu_custom_call.1} parent=5 // pred_check_branch
        %203 = sbr.rel (%p200) target = $region40
      $region39: #{tpu_custom_call.1} parent=5 // pred_region
        %s204 = ssub.s32 %s15, 1
        %s205 = sand.u32 %s28, 1
        %s206 = scalar_lea.sflag [#allocation4], %s205
        %s207 = sand.u32 %s28, 1
        %s208 = smul.addr %s207, 16
        %s209 = scalar_lea.vmem [#allocation3], %s208
        // Predicated region
        $region41: #{tpu_custom_call.1} parent=39 // pred_check
          %p210 = pneg %p41
        $region42: #{tpu_custom_call.1} parent=39 // pred_check_branch
          %212 = sbr.rel (%p210) target = $region44
        $region43: #{tpu_custom_call.1} parent=39 // pred_region
          %214 = dma.done %s206, 256
        $region44: #{tpu_custom_call.1} parent=39 // pred_fallthru
          _
        %s215 = sand.u32 %s28, 1
        %s216 = scalar_lea.sflag [#allocation4], %s215
        %s217 = sand.u32 %s28, 1
        %s218 = smul.addr %s217, 16
        %s219 = scalar_lea.vmem [#allocation3], %s218
        %p220 = pneg %p41
        %p221 = pneg %p38
        %p222 = pneg %p62
        %p223 = pneg %p59
        %p224 = pneg %p83
        %p225 = pneg %p80
        %p226 = pneg %p104
        %p227 = pneg %p101
        %p228 = pneg %p125
        %p229 = pneg %p122
        %p230 = pneg %p146
        %p231 = pneg %p143
        %p232 = scmp.eq.s32.totalorder %s20, 0
        // Predicated region
        $region45: #{tpu_custom_call.1} parent=39 // pred_check
          %p233 = pneg %p232
        $region46: #{tpu_custom_call.1} parent=39 // pred_check_branch
          %235 = sbr.rel (%p233) target = $region48
        $region47: #{tpu_custom_call.1} parent=39 // pred_region
          %vm236 = vcmask 261120
          %237 = vst.msk [vmem:[#allocation6] sm:$0xff] %vm236, 0.0
          %238 = vst.msk [vmem:[#allocation6 + $0x8] sm:$0xff] %vm236, 0.0
          %239 = vst.msk [vmem:[#allocation6 + $0x10] sm:$0xff] %vm236, 0.0
          %240 = vst.msk [vmem:[#allocation6 + $0x18] sm:$0xff] %vm236, 0.0
          %241 = vst.msk [vmem:[#allocation6 + $0x20] sm:$0xff] %vm236, 0.0
          %242 = vst.msk [vmem:[#allocation6 + $0x28] sm:$0xff] %vm236, 0.0
          %243 = vst.msk [vmem:[#allocation6 + $0x30] sm:$0xff] %vm236, 0.0
          %244 = vst.msk [vmem:[#allocation6 + $0x38] sm:$0xff] %vm236, 0.0
          %vm245 = vcmask 123904
          %246 = vst.msk [vmem:[#allocation2] sm:$0x3] %vm245, 0.0
        $region48: #{tpu_custom_call.1} parent=39 // pred_fallthru
          _
        %v247 = vld [vmem:[%s209] sm:$0xff]
        %v248 = vld [vmem:[%s209 + $0x8] sm:$0xff]
        %v249 = vld [vmem:[%s1] sm:$0xff]
        %v250 = vld [vmem:[%s1 + $0x8] sm:$0xff]
        %v251 = vld [vmem:[%s1 + $0x10] sm:$0xff]
        %v252 = vld [vmem:[%s1 + $0x18] sm:$0xff]
        %v253 = vld [vmem:[%s4] sm:$0x1]
        %v255 = vperm.slane %v253, 0
        %vm257 = vcmask 261120
        %v259 = vsel %vm257, %v247, 0
        %v262 = vsel %vm257, %v248, 0
        %264 = vmatpush.msra.mxu0 0.0
        %265 = vmatpush.msra.mxu0 0.0
        %266 = vmatpush.msra.mxu0 0.0
        %267 = vmatpush.msra.mxu0 0.0
        %268 = vmatpush.msra.mxu0 0.0
        %269 = vmatpush.msra.mxu0 0.0
        %270 = vmatpush.msra.mxu0 0.0
        %271 = vmatpush.msra.mxu0 0.0
        %272 = vmatpush.msra.mxu0 0.0
        %273 = vmatpush.msra.mxu0 0.0
        %274 = vmatpush.msra.mxu0 0.0
        %275 = vmatpush.msra.mxu0 0.0
        %276 = vmatpush.msra.mxu0 %v252
        %277 = vmatpush.msra.mxu0 %v251
        %278 = vmatpush.msra.mxu0 %v250
        %279 = vmatpush.msra.mxu0 %v249
        %280 = vmatmul.f32.gmra.mxu0 %v259
        %v281 = vpop.f32.mrf.mxu0
        %v282 = vadd.f32 %v255, %v281
        %283 = vmatmul.f32.gmra.mxu0 %v262
        %v284 = vpop.f32.mrf.mxu0
        %v285 = vadd.f32 %v255, %v284
        %286 = vdwg.mxu0
        %vm287 = vcmask 130048
        %v288 = vsel %vm287, %v282, -inf
        %v289 = vsel %vm287, %v285, -inf
        %v290 = vmax.f32 %v288, %v289
        %v291 = vsub.f32 %v282, %v290
        %v292 = vsub.f32 %v285, %v290
        %v293 = vmul.f32 %v291, 1.442695
        %v294 = vpow.pop %v293
        %v295 = vmul.f32 %v292, 1.442695
        %v296 = vpow.pop %v295
        %v297 = vsel %vm287, %v294, 0.0
        %v298 = vsel %vm287, %v296, 0.0
        %v299 = vadd.f32 %v297, %v298
        %v300 = vrcp.pop %v299
        %v301 = vmul.f32 %v294, %v300
        %v302 = vmul.f32 %v296, %v300
        %v303 = vld [vmem:[#allocation2] sm:$0x3]
        %v304 = vsel %vm287, %v301, 0.0
        %v305 = vrot.slane %v304, 4
        %v306 = vadd.f32 %v304, %v305
        %v307 = vrot.slane %v306, 2
        %v308 = vadd.f32 %v306, %v307
        %v309 = vrot.slane %v308, 1
        %v310 = vadd.f32 %v308, %v309
        %v311 = vsel %vm287, %v302, 0.0
        %v312 = vrot.slane %v311, 4
        %v313 = vadd.f32 %v311, %v312
        %v314 = vrot.slane %v313, 2
        %v315 = vadd.f32 %v313, %v314
        %v316 = vrot.slane %v315, 1
        %v317 = vadd.f32 %v315, %v316
        %vm320 = vcmask 1041409
        %v321 = vsel %vm320, %v317, %v310
        %v323 = vadd.f32 %v303, %v321
        %vm324 = vcmask 123904
        %325 = vst.msk [vmem:[#allocation2] sm:$0x3] %vm324, %v323
        %v326 = vmul.f32 %v247, %v247
        %v327 = vmul.f32 %v248, %v248
        %328 = vxpose.xlu0.b32.start [1/16] %v301, 128
        %329 = vxpose.xlu0.b32.cont [2/16] 0.0, 128
        %330 = vxpose.xlu0.b32.cont [3/16] 0.0, 128
        %331 = vxpose.xlu0.b32.cont [4/16] 0.0, 128
        %332 = vxpose.xlu0.b32.cont [5/16] 0.0, 128
        %333 = vxpose.xlu0.b32.cont [6/16] 0.0, 128
        %334 = vxpose.xlu0.b32.cont [7/16] 0.0, 128
        %335 = vxpose.xlu0.b32.cont [8/16] 0.0, 128
        %336 = vxpose.xlu0.b32.cont [9/16] 0.0, 128
        %337 = vxpose.xlu0.b32.cont [10/16] 0.0, 128
        %338 = vxpose.xlu0.b32.cont [11/16] 0.0, 128
        %339 = vxpose.xlu0.b32.cont [12/16] 0.0, 128
        %340 = vxpose.xlu0.b32.cont [13/16] 0.0, 128
        %341 = vxpose.xlu0.b32.cont [14/16] 0.0, 128
        %342 = vxpose.xlu0.b32.cont [15/16] 0.0, 128
        %343 = vxpose.xlu0.b32.end [16/16] 0.0, 128
        %v344 = vpop.trf.xlu0
        %v345 = vpop.trf.xlu0
        %v346 = vpop.trf.xlu0
        %v347 = vpop.trf.xlu0
        %v348 = vpop.trf.xlu0
        %v349 = vpop.trf.xlu0
        %v350 = vpop.trf.xlu0
        %v351 = vpop.trf.xlu0
        %v352 = vpop.trf.xlu0
        %v353 = vpop.trf.xlu0
        %v354 = vpop.trf.xlu0
        %v355 = vpop.trf.xlu0
        %v356 = vpop.trf.xlu0
        %v357 = vpop.trf.xlu0
        %v358 = vpop.trf.xlu0
        %v359 = vpop.trf.xlu0
        %vm360 = vcmask 64512
        %v362 = vsel %vm360, %v344, 0
        %v365 = vsel %vm360, %v345, 0
        %367 = vmatpush.msra.mxu0 0.0
        %368 = vmatpush.msra.mxu0 0.0
        %369 = vmatpush.msra.mxu0 0.0
        %370 = vmatpush.msra.mxu0 0.0
        %371 = vmatpush.msra.mxu0 0.0
        %372 = vmatpush.msra.mxu0 0.0
        %373 = vmatpush.msra.mxu0 0.0
        %374 = vmatpush.msra.mxu0 0.0
        %375 = vmatpush.msra.mxu0 0.0
        %376 = vmatpush.msra.mxu0 0.0
        %377 = vmatpush.msra.mxu0 0.0
        %378 = vmatpush.msra.mxu0 0.0
        %379 = vmatpush.msra.mxu0 0.0
        %380 = vmatpush.msra.mxu0 0.0
        %381 = vmatpush.msra.mxu0 0.0
        %382 = vmatpush.msra.mxu0 %v247
        %383 = vmatmul.f32.gmra.mxu0 %v362
        %v384 = vpop.f32.mrf.mxu0
        %v385 = vadd.f32 0.0, %v384
        %386 = vmatmul.f32.gmra.mxu0 %v365
        %v387 = vpop.f32.mrf.mxu0
        %v388 = vadd.f32 0.0, %v387
        %389 = vdwg.mxu0
        %390 = vxpose.xlu0.b32.start [1/16] %v302, 128
        %391 = vxpose.xlu0.b32.cont [2/16] 0.0, 128
        %392 = vxpose.xlu0.b32.cont [3/16] 0.0, 128
        %393 = vxpose.xlu0.b32.cont [4/16] 0.0, 128
        %394 = vxpose.xlu0.b32.cont [5/16] 0.0, 128
        %395 = vxpose.xlu0.b32.cont [6/16] 0.0, 128
        %396 = vxpose.xlu0.b32.cont [7/16] 0.0, 128
        %397 = vxpose.xlu0.b32.cont [8/16] 0.0, 128
        %398 = vxpose.xlu0.b32.cont [9/16] 0.0, 128
        %399 = vxpose.xlu0.b32.cont [10/16] 0.0, 128
        %400 = vxpose.xlu0.b32.cont [11/16] 0.0, 128
        %401 = vxpose.xlu0.b32.cont [12/16] 0.0, 128
        %402 = vxpose.xlu0.b32.cont [13/16] 0.0, 128
        %403 = vxpose.xlu0.b32.cont [14/16] 0.0, 128
        %404 = vxpose.xlu0.b32.cont [15/16] 0.0, 128
        %405 = vxpose.xlu0.b32.end [16/16] 0.0, 128
        %v406 = vpop.trf.xlu0
        %v407 = vpop.trf.xlu0
        %v408 = vpop.trf.xlu0
        %v409 = vpop.trf.xlu0
        %v410 = vpop.trf.xlu0
        %v411 = vpop.trf.xlu0
        %v412 = vpop.trf.xlu0
        %v413 = vpop.trf.xlu0
        %v414 = vpop.trf.xlu0
        %v415 = vpop.trf.xlu0
        %v416 = vpop.trf.xlu0
        %v417 = vpop.trf.xlu0
        %v418 = vpop.trf.xlu0
        %v419 = vpop.trf.xlu0
        %v420 = vpop.trf.xlu0
        %v421 = vpop.trf.xlu0
        %v423 = vsel %vm360, %v406, 0
        %v426 = vsel %vm360, %v407, 0
        %428 = vmatpush.msra.mxu0 0.0
        %429 = vmatpush.msra.mxu0 0.0
        %430 = vmatpush.msra.mxu0 0.0
        %431 = vmatpush.msra.mxu0 0.0
        %432 = vmatpush.msra.mxu0 0.0
        %433 = vmatpush.msra.mxu0 0.0
        %434 = vmatpush.msra.mxu0 0.0
        %435 = vmatpush.msra.mxu0 0.0
        %436 = vmatpush.msra.mxu0 0.0
        %437 = vmatpush.msra.mxu0 0.0
        %438 = vmatpush.msra.mxu0 0.0
        %439 = vmatpush.msra.mxu0 0.0
        %440 = vmatpush.msra.mxu0 0.0
        %441 = vmatpush.msra.mxu0 0.0
        %442 = vmatpush.msra.mxu0 0.0
        %443 = vmatpush.msra.mxu0 %v248
        %444 = vmatmul.f32.gmra.mxu0 %v423
        %v445 = vpop.f32.mrf.mxu0
        %v446 = vadd.f32 0.0, %v445
        %447 = vmatmul.f32.gmra.mxu0 %v426
        %v448 = vpop.f32.mrf.mxu0
        %v449 = vadd.f32 0.0, %v448
        %450 = vdwg.mxu0
        %451 = vmatpush.msra.mxu0 0.0
        %452 = vmatpush.msra.mxu0 0.0
        %453 = vmatpush.msra.mxu0 0.0
        %454 = vmatpush.msra.mxu0 0.0
        %455 = vmatpush.msra.mxu0 0.0
        %456 = vmatpush.msra.mxu0 0.0
        %457 = vmatpush.msra.mxu0 0.0
        %458 = vmatpush.msra.mxu0 0.0
        %459 = vmatpush.msra.mxu0 0.0
        %460 = vmatpush.msra.mxu0 0.0
        %461 = vmatpush.msra.mxu0 0.0
        %462 = vmatpush.msra.mxu0 0.0
        %463 = vmatpush.msra.mxu0 0.0
        %464 = vmatpush.msra.mxu0 0.0
        %465 = vmatpush.msra.mxu0 0.0
        %466 = vmatpush.msra.mxu0 %v326
        %467 = vmatmul.f32.gmra.mxu0 %v362
        %v468 = vpop.f32.mrf.mxu0
        %v469 = vadd.f32 0.0, %v468
        %470 = vmatmul.f32.gmra.mxu0 %v365
        %v471 = vpop.f32.mrf.mxu0
        %v472 = vadd.f32 0.0, %v471
        %473 = vdwg.mxu0
        %474 = vmatpush.msra.mxu0 0.0
        %475 = vmatpush.msra.mxu0 0.0
        %476 = vmatpush.msra.mxu0 0.0
        %477 = vmatpush.msra.mxu0 0.0
        %478 = vmatpush.msra.mxu0 0.0
        %479 = vmatpush.msra.mxu0 0.0
        %480 = vmatpush.msra.mxu0 0.0
        %481 = vmatpush.msra.mxu0 0.0
        %482 = vmatpush.msra.mxu0 0.0
        %483 = vmatpush.msra.mxu0 0.0
        %484 = vmatpush.msra.mxu0 0.0
        %485 = vmatpush.msra.mxu0 0.0
        %486 = vmatpush.msra.mxu0 0.0
        %487 = vmatpush.msra.mxu0 0.0
        %488 = vmatpush.msra.mxu0 0.0
        %489 = vmatpush.msra.mxu0 %v327
        %490 = vmatmul.f32.gmra.mxu0 %v423
        %v491 = vpop.f32.mrf.mxu0
        %v492 = vadd.f32 0.0, %v491
        %493 = vmatmul.f32.gmra.mxu0 %v426
        %v494 = vpop.f32.mrf.mxu0
        %v495 = vadd.f32 0.0, %v494
        %496 = vdwg.mxu0
        %v497 = vld [vmem:[#allocation6] sm:$0xff]
        %v498 = vld [vmem:[#allocation6 + $0x8] sm:$0xff]
        %v499 = vld [vmem:[#allocation6 + $0x20] sm:$0xff]
        %v500 = vld [vmem:[#allocation6 + $0x28] sm:$0xff]
        %v501 = vadd.f32 %v497, %v385
        %v502 = vadd.f32 %v498, %v388
        %v503 = vadd.f32 %v499, %v446
        %v504 = vadd.f32 %v500, %v449
        %505 = vst.msk [vmem:[#allocation6] sm:$0xff] %vm257, %v501
        %506 = vst.msk [vmem:[#allocation6 + $0x8] sm:$0xff] %vm257, %v502
        %507 = vst.msk [vmem:[#allocation6 + $0x20] sm:$0xff] %vm257, %v503
        %508 = vst.msk [vmem:[#allocation6 + $0x28] sm:$0xff] %vm257, %v504
        %s509 = scalar_lea.vmem [#allocation6], 16
        %v510 = vld [vmem:[%s509] sm:$0xff]
        %v511 = vld [vmem:[%s509 + $0x8] sm:$0xff]
        %v512 = vld [vmem:[%s509 + $0x20] sm:$0xff]
        %v513 = vld [vmem:[%s509 + $0x28] sm:$0xff]
        %v514 = vadd.f32 %v510, %v469
        %v515 = vadd.f32 %v511, %v472
        %v516 = vadd.f32 %v512, %v492
        %v517 = vadd.f32 %v513, %v495
        %518 = vst.msk [vmem:[%s509] sm:$0xff] %vm257, %v514
        %519 = vst.msk [vmem:[%s509 + $0x8] sm:$0xff] %vm257, %v515
        %520 = vst.msk [vmem:[%s509 + $0x20] sm:$0xff] %vm257, %v516
        %521 = vst.msk [vmem:[%s509 + $0x28] sm:$0xff] %vm257, %v517
        %p522 = scmp.eq.s32.totalorder %s20, 3
        // Predicated region
        $region49: #{tpu_custom_call.1} parent=39 // pred_check
          %p523 = pneg %p522
        $region50: #{tpu_custom_call.1} parent=39 // pred_check_branch
          %525 = sbr.rel (%p523) target = $region52
        $region51: #{tpu_custom_call.1} parent=39 // pred_region
          %v526 = vld [vmem:[%s3] sm:$0xff]
          %v527 = vld [vmem:[%s3 + $0x8] sm:$0xff]
          %v528 = vmul.f32 %v526, %v526
          %v529 = vmul.f32 %v527, %v527
          %v530 = vadd.f32 %v528, 1e-06
          %v531 = vadd.f32 %v529, 1e-06
          %v532 = vrcp.pop %v530
          %v533 = vmul.f32 %v530, %v532
          %v534 = vsub.f32 1.0, %v533
          %v535 = vmul.f32 %v532, %v534
          %v536 = vadd.f32 %v532, %v535
          %vm537 = vweird.f32 %v530
          %vm538 = vweird.f32 %v532
          %vm539 = vmor %vm537, %vm538
          %v540 = vsel %vm539, %v532, %v536
          %v541 = vand.u32 2147483647, %v530
          %vm542 = vcmp.eq.f32.partialorder %v541, 8.507059e+37
          %v543 = vand.u32 %v530, 2147483648
          %v544 = vor.u32 1.1754944e-38, %v543
          %v545 = vsel %vm542, %v544, %v540
          %v546 = vrcp.pop %v531
          %v547 = vmul.f32 %v531, %v546
          %v548 = vsub.f32 1.0, %v547
          %v549 = vmul.f32 %v546, %v548
          %v550 = vadd.f32 %v546, %v549
          %vm551 = vweird.f32 %v531
          %vm552 = vweird.f32 %v546
          %vm553 = vmor %vm551, %vm552
          %v554 = vsel %vm553, %v546, %v550
          %v555 = vand.u32 2147483647, %v531
          %vm556 = vcmp.eq.f32.partialorder %v555, 8.507059e+37
          %v557 = vand.u32 %v531, 2147483648
          %v558 = vor.u32 1.1754944e-38, %v557
          %v559 = vsel %vm556, %v558, %v554
          %v560 = vld [vmem:[%s2] sm:$0xff]
          %v561 = vld [vmem:[%s2 + $0x8] sm:$0xff]
          %v562 = vmul.f32 %v560, 0.01
          %v563 = vmul.f32 %v561, 0.01
          %v564 = vld [vmem:[#allocation2] sm:$0x3]
          %v565 = vperm.slane %v564, 0
          %v566 = vlaneseq
          %v567 = vshrl.u32 %v566, 7
          %569 = vset.pattern.permute.xlu0 %v567
          %570 = vperm.xlu0 %569, %v565
          %v571 = vpop.permute.xlu0 %570
          %v572 = vlaneseq
          %v573 = vshrl.u32 %v572, 7
          %v574 = vadd.s32 %v573, 8
          %575 = vset.pattern.permute.xlu0 %v574
          %576 = vperm.xlu0 %575, %v565
          %v577 = vpop.permute.xlu0 %576
          %v578 = vperm.slane %v564, 1
          %v579 = vlaneseq
          %v580 = vshrl.u32 %v579, 7
          %582 = vset.pattern.permute.xlu0 %v580
          %583 = vperm.xlu0 %582, %v578
          %v584 = vpop.permute.xlu0 %583
          %v585 = vlaneseq
          %v586 = vshrl.u32 %v585, 7
          %v587 = vadd.s32 %v586, 8
          %588 = vset.pattern.permute.xlu0 %v587
          %589 = vperm.xlu0 %588, %v578
          %v590 = vpop.permute.xlu0 %589
          %v591 = vld [vmem:[#allocation6] sm:$0xff]
          %v592 = vld [vmem:[#allocation6 + $0x8] sm:$0xff]
          %v593 = vld [vmem:[#allocation6 + $0x20] sm:$0xff]
          %v594 = vld [vmem:[#allocation6 + $0x28] sm:$0xff]
          %v595 = vld [vmem:[%s509] sm:$0xff]
          %v596 = vld [vmem:[%s509 + $0x8] sm:$0xff]
          %v597 = vld [vmem:[%s509 + $0x20] sm:$0xff]
          %v598 = vld [vmem:[%s509 + $0x28] sm:$0xff]
          %v599 = vmul.f32 %v571, %v562
          %v600 = vmul.f32 %v577, %v563
          %v601 = vmul.f32 %v584, %v562
          %v602 = vmul.f32 %v590, %v563
          %v603 = vmul.f32 %v599, %v562
          %v604 = vmul.f32 %v600, %v563
          %v605 = vmul.f32 %v601, %v562
          %v606 = vmul.f32 %v602, %v563
          %v607 = vmul.f32 %v591, %v562
          %v608 = vmul.f32 %v592, %v563
          %v609 = vmul.f32 %v593, %v562
          %v610 = vmul.f32 %v594, %v563
          %v611 = vadd.f32 %v603, %v595
          %v612 = vadd.f32 %v604, %v596
          %v613 = vadd.f32 %v605, %v597
          %v614 = vadd.f32 %v606, %v598
          %v615 = vmul.f32 %v607, 2.0
          %v616 = vmul.f32 %v608, 2.0
          %v617 = vmul.f32 %v609, 2.0
          %v618 = vmul.f32 %v610, 2.0
          %v619 = vsub.f32 %v611, %v615
          %v620 = vsub.f32 %v612, %v616
          %v621 = vsub.f32 %v613, %v617
          %v622 = vsub.f32 %v614, %v618
          %v623 = vmul.f32 %v545, %v545
          %v624 = vmul.f32 %v559, %v559
          %v625 = vmul.f32 %v619, %v623
          %v626 = vmul.f32 %v620, %v624
          %v627 = vmul.f32 %v621, %v623
          %v628 = vmul.f32 %v622, %v624
          %v629 = vsub.f32 %v625, %v571
          %v630 = vsub.f32 %v626, %v577
          %v631 = vsub.f32 %v627, %v584
          %v632 = vsub.f32 %v628, %v590
          %v633 = vsub.f32 %v591, %v599
          %v634 = vsub.f32 %v592, %v600
          %v635 = vsub.f32 %v593, %v601
          %v636 = vsub.f32 %v594, %v602
          %v637 = vmul.f32 %v633, %v545
          %v638 = vmul.f32 %v634, %v559
          %v639 = vmul.f32 %v635, %v545
          %v640 = vmul.f32 %v636, %v559
          %v641 = vmul.f32 %v637, %v637
          %v642 = vmul.f32 %v638, %v638
          %v643 = vmul.f32 %v639, %v639
          %v644 = vmul.f32 %v640, %v640
          %v645 = vsel %vm257, %v641, 0.0
          %646 = vadd.xlane.f32.xlu0 %v645
          %v647 = vpop.xlane.xlu0 %646
          %v648 = vsel %vm257, %v642, 0.0
          %649 = vadd.xlane.f32.xlu0 %v648
          %v650 = vpop.xlane.xlu0 %649
          %v651 = vsel %vm257, %v643, 0.0
          %652 = vadd.xlane.f32.xlu0 %v651
          %v653 = vpop.xlane.xlu0 %652
          %v654 = vsel %vm257, %v644, 0.0
          %655 = vadd.xlane.f32.xlu0 %v654
          %v656 = vpop.xlane.xlu0 %655
          %v657 = vmax.f32 %v647, 1e-24
          %v658 = vmax.f32 %v650, 1e-24
          %v659 = vmax.f32 %v653, 1e-24
          %v660 = vmax.f32 %v656, 1e-24
          %v661 = vrsqrt.pop %v657
          %v662 = vmul.f32 %v661, %v657
          %v663 = vmul.f32 %v662, %v661
          %v664 = vmul.f32 0.5, %v663
          %v665 = vsub.f32 1.5, %v664
          %v666 = vmul.f32 %v661, %v665
          %vm667 = vweird.f32 %v657
          %vm668 = vweird.f32 %v661
          %vm669 = vmor %vm667, %vm668
          %v670 = vsel %vm669, %v661, %v666
          %v671 = vrsqrt.pop %v658
          %v672 = vmul.f32 %v671, %v658
          %v673 = vmul.f32 %v672, %v671
          %v674 = vmul.f32 0.5, %v673
          %v675 = vsub.f32 1.5, %v674
          %v676 = vmul.f32 %v671, %v675
          %vm677 = vweird.f32 %v658
          %vm678 = vweird.f32 %v671
          %vm679 = vmor %vm677, %vm678
          %v680 = vsel %vm679, %v671, %v676
          %v681 = vrsqrt.pop %v659
          %v682 = vmul.f32 %v681, %v659
          %v683 = vmul.f32 %v682, %v681
          %v684 = vmul.f32 0.5, %v683
          %v685 = vsub.f32 1.5, %v684
          %v686 = vmul.f32 %v681, %v685
          %vm687 = vweird.f32 %v659
          %vm688 = vweird.f32 %v681
          %vm689 = vmor %vm687, %vm688
          %v690 = vsel %vm689, %v681, %v686
          %v691 = vrsqrt.pop %v660
          %v692 = vmul.f32 %v691, %v660
          %v693 = vmul.f32 %v692, %v691
          %v694 = vmul.f32 0.5, %v693
          %v695 = vsub.f32 1.5, %v694
          %v696 = vmul.f32 %v691, %v695
          %vm697 = vweird.f32 %v660
          %vm698 = vweird.f32 %v691
          %vm699 = vmor %vm697, %vm698
          %v700 = vsel %vm699, %v691, %v696
          %v701 = vmul.f32 %v637, %v670
          %v702 = vmul.f32 %v638, %v680
          %v703 = vmul.f32 %v639, %v690
          %v704 = vmul.f32 %v640, %v700
          %v705 = vmul.f32 %v701, %v701
          %v706 = vmul.f32 %v702, %v702
          %v707 = vmul.f32 %v703, %v703
          %v708 = vmul.f32 %v704, %v704
          %v709 = vsel %vm257, %v705, 0.0
          %v710 = vsel %vm257, %v706, 0.0
          %v711 = vadd.f32 %v709, %v710
          %712 = vadd.xlane.f32.xlu0 %v711
          %v713 = vpop.xlane.xlu0 %712
          %v714 = vrot.slane %v713, 4
          %v715 = vadd.f32 %v713, %v714
          %v716 = vrot.slane %v715, 2
          %v717 = vadd.f32 %v715, %v716
          %v718 = vrot.slane %v717, 1
          %v719 = vadd.f32 %v717, %v718
          %v720 = vsel %vm257, %v707, 0.0
          %v721 = vsel %vm257, %v708, 0.0
          %v722 = vadd.f32 %v720, %v721
          %723 = vadd.xlane.f32.xlu0 %v722
          %v724 = vpop.xlane.xlu0 %723
          %v725 = vrot.slane %v724, 4
          %v726 = vadd.f32 %v724, %v725
          %v727 = vrot.slane %v726, 2
          %v728 = vadd.f32 %v726, %v727
          %v729 = vrot.slane %v728, 1
          %v730 = vadd.f32 %v728, %v729
          %v731 = vmax.f32 %v719, 1e-24
          %v732 = vmax.f32 %v730, 1e-24
          %v733 = vrsqrt.pop %v731
          %v734 = vmul.f32 %v733, %v731
          %v735 = vmul.f32 %v734, %v733
          %v736 = vmul.f32 0.5, %v735
          %v737 = vsub.f32 1.5, %v736
          %v738 = vmul.f32 %v733, %v737
          %vm739 = vweird.f32 %v731
          %vm740 = vweird.f32 %v733
          %vm741 = vmor %vm739, %vm740
          %v742 = vsel %vm741, %v733, %v738
          %v743 = vrsqrt.pop %v732
          %v744 = vmul.f32 %v743, %v732
          %v745 = vmul.f32 %v744, %v743
          %v746 = vmul.f32 0.5, %v745
          %v747 = vsub.f32 1.5, %v746
          %v748 = vmul.f32 %v743, %v747
          %vm749 = vweird.f32 %v732
          %vm750 = vweird.f32 %v743
          %vm751 = vmor %vm749, %vm750
          %v752 = vsel %vm751, %v743, %v748
          %v753 = vmul.f32 %v701, %v742
          %v754 = vmul.f32 %v702, %v742
          %v755 = vmul.f32 %v703, %v752
          %v756 = vmul.f32 %v704, %v752
          %v757 = vmul.f32 %v629, %v629
          %v758 = vmul.f32 %v630, %v630
          %v759 = vmul.f32 %v631, %v631
          %v760 = vmul.f32 %v632, %v632
          %v761 = vsel %vm257, %v757, 0.0
          %v762 = vsel %vm257, %v758, 0.0
          %v763 = vadd.f32 %v761, %v762
          %764 = vadd.xlane.f32.xlu0 %v763
          %v765 = vpop.xlane.xlu0 %764
          %v766 = vrot.slane %v765, 4
          %v767 = vadd.f32 %v765, %v766
          %v768 = vrot.slane %v767, 2
          %v769 = vadd.f32 %v767, %v768
          %v770 = vrot.slane %v769, 1
          %v771 = vadd.f32 %v769, %v770
          %v772 = vsel %vm257, %v759, 0.0
          %v773 = vsel %vm257, %v760, 0.0
          %v774 = vadd.f32 %v772, %v773
          %775 = vadd.xlane.f32.xlu0 %v774
          %v776 = vpop.xlane.xlu0 %775
          %v777 = vrot.slane %v776, 4
          %v778 = vadd.f32 %v776, %v777
          %v779 = vrot.slane %v778, 2
          %v780 = vadd.f32 %v778, %v779
          %v781 = vrot.slane %v780, 1
          %v782 = vadd.f32 %v780, %v781
          %v783 = vmax.f32 %v771, 1e-24
          %v784 = vmax.f32 %v782, 1e-24
          %v785 = vrsqrt.pop %v783
          %v786 = vmul.f32 %v785, %v783
          %v787 = vmul.f32 %v786, %v785
          %v788 = vmul.f32 0.5, %v787
          %v789 = vsub.f32 1.5, %v788
          %v790 = vmul.f32 %v785, %v789
          %vm791 = vweird.f32 %v783
          %vm792 = vweird.f32 %v785
          %vm793 = vmor %vm791, %vm792
          %v794 = vsel %vm793, %v785, %v790
          %v795 = vrsqrt.pop %v784
          %v796 = vmul.f32 %v795, %v784
          %v797 = vmul.f32 %v796, %v795
          %v798 = vmul.f32 0.5, %v797
          %v799 = vsub.f32 1.5, %v798
          %v800 = vmul.f32 %v795, %v799
          %vm801 = vweird.f32 %v784
          %vm802 = vweird.f32 %v795
          %vm803 = vmor %vm801, %vm802
          %v804 = vsel %vm803, %v795, %v800
          %v805 = vmul.f32 %v629, %v794
          %v806 = vmul.f32 %v630, %v794
          %v807 = vmul.f32 %v631, %v804
          %v808 = vmul.f32 %v632, %v804
          %v809 = vmul.f32 %v805, %v805
          %v810 = vmul.f32 %v806, %v806
          %v811 = vmul.f32 %v807, %v807
          %v812 = vmul.f32 %v808, %v808
          %v813 = vsel %vm257, %v809, 0.0
          %v814 = vsel %vm257, %v810, 0.0
          %v815 = vadd.f32 %v813, %v814
          %816 = vadd.xlane.f32.xlu0 %v815
          %v817 = vpop.xlane.xlu0 %816
          %v818 = vrot.slane %v817, 4
          %v819 = vadd.f32 %v817, %v818
          %v820 = vrot.slane %v819, 2
          %v821 = vadd.f32 %v819, %v820
          %v822 = vrot.slane %v821, 1
          %v823 = vadd.f32 %v821, %v822
          %v824 = vsel %vm257, %v811, 0.0
          %v825 = vsel %vm257, %v812, 0.0
          %v826 = vadd.f32 %v824, %v825
          %827 = vadd.xlane.f32.xlu0 %v826
          %v828 = vpop.xlane.xlu0 %827
          %v829 = vrot.slane %v828, 4
          %v830 = vadd.f32 %v828, %v829
          %v831 = vrot.slane %v830, 2
          %v832 = vadd.f32 %v830, %v831
          %v833 = vrot.slane %v832, 1
          %v834 = vadd.f32 %v832, %v833
          %v835 = vmax.f32 %v823, 1e-24
          %v836 = vmax.f32 %v834, 1e-24
          %v837 = vrsqrt.pop %v835
          %v838 = vmul.f32 %v837, %v835
          %v839 = vmul.f32 %v838, %v837
          %v840 = vmul.f32 0.5, %v839
          %v841 = vsub.f32 1.5, %v840
          %v842 = vmul.f32 %v837, %v841
          %vm843 = vweird.f32 %v835
          %vm844 = vweird.f32 %v837
          %vm845 = vmor %vm843, %vm844
          %v846 = vsel %vm845, %v837, %v842
          %v847 = vrsqrt.pop %v836
          %v848 = vmul.f32 %v847, %v836
          %v849 = vmul.f32 %v848, %v847
          %v850 = vmul.f32 0.5, %v849
          %v851 = vsub.f32 1.5, %v850
          %v852 = vmul.f32 %v847, %v851
          %vm853 = vweird.f32 %v836
          %vm854 = vweird.f32 %v847
          %vm855 = vmor %vm853, %vm854
          %v856 = vsel %vm855, %v847, %v852
          %v857 = vmul.f32 %v805, %v846
          %v858 = vmul.f32 %v806, %v846
          %v859 = vmul.f32 %v807, %v856
          %v860 = vmul.f32 %v808, %v856
          %861 = vst.msk [vmem:[#allocation6] sm:$0xff] %vm257, %v753
          %862 = vst.msk [vmem:[#allocation6 + $0x8] sm:$0xff] %vm257, %v754
          %863 = vst.msk [vmem:[#allocation6 + $0x20] sm:$0xff] %vm257, %v755
          %864 = vst.msk [vmem:[#allocation6 + $0x28] sm:$0xff] %vm257, %v756
          %865 = vst.msk [vmem:[%s509] sm:$0xff] %vm257, %v857
          %866 = vst.msk [vmem:[%s509 + $0x8] sm:$0xff] %vm257, %v858
          %867 = vst.msk [vmem:[%s509 + $0x20] sm:$0xff] %vm257, %v859
          %868 = vst.msk [vmem:[%s509 + $0x28] sm:$0xff] %vm257, %v860
        $region52: #{tpu_custom_call.1} parent=39 // pred_fallthru
          _
        // Predicated region
        $region53: #{tpu_custom_call.1} parent=39 // pred_check
          %p869 = pneg %p143
        $region54: #{tpu_custom_call.1} parent=39 // pred_check_branch
          %871 = sbr.rel (%p869) target = $region56
        $region55: #{tpu_custom_call.1} parent=39 // pred_region
          %873 = vsyncadd [#allocation5], 0
          %s874 = sshll.u32 [#allocation6], 4
          %s875 = int_to_ptr.vmem [resolvable:$true] %s874
          %s876 = sshll.u32 %s5, 4
          %s877 = int_to_ptr.hbm [resolvable:$true] %s876
          %882 = dma.vmem_to_hbm [thread:$0]  %s875, 1024, %s877, [#allocation5], 128, 128, 8
        $region56: #{tpu_custom_call.1} parent=39 // pred_fallthru
          _
        // Predicated region
        $region57: #{tpu_custom_call.1} parent=39 // pred_check
          %p883 = pneg %p143
        $region58: #{tpu_custom_call.1} parent=39 // pred_check_branch
          %885 = sbr.rel (%p883) target = $region60
        $region59: #{tpu_custom_call.1} parent=39 // pred_region
          %887 = dma.done [#allocation5], 1024
        $region60: #{tpu_custom_call.1} parent=39 // pred_fallthru
          _
      $region40: #{tpu_custom_call.1} parent=5 // pred_fallthru
        _
      %p888 = scmp.le.s32.totalorder 2, %s15
      // Predicated region
      $region61: #{tpu_custom_call.1} parent=5 // pred_check
        %p889 = pneg %p888
      $region62: #{tpu_custom_call.1} parent=5 // pred_check_branch
        %891 = sbr.rel (%p889) target = $region64
      $region63: #{tpu_custom_call.1} parent=5 // pred_region
        %s892 = ssub.s32 %s15, 2
      $region64: #{tpu_custom_call.1} parent=5 // pred_fallthru
        _
    $region6: #{tpu_custom_call.1} parent=1 // loop_footer
      %s19 = sadd.s32 1, %s15
    $region7: #{tpu_custom_call.1} parent=1 // loop_footer_branch
      %14 = sbr.rel target = $region3
    $region8: #{tpu_custom_call.1} parent=1 // loop_exit
      _
    %893 = vsyncpa [#allocation4], 1
    %s894 = scalar_lea.sflag [#allocation4], 1
    %895 = vsyncpa %s894, 1
    %896 = vsyncpa [#allocation5], 1
    %s897 = scalar_lea.sflag [#allocation5], 1
    %898 = vsyncpa %s897, 1

</llo_original>
